<compile_context>
chip_gen: v5e
topology: v5e:2x2
jax: 0.10.0
libtpu: 0.0.40
codegen_flags: <defaults>
</compile_context>

<pallas_src>
import functools

import jax
import jax.numpy as jnp
from jax import lax
from jax.experimental import pallas as pl
from jax.experimental.pallas import tpu as pltpu

LANES = 128            # lane width of a vreg
MAX_BLOCK_ROWS = 2048  # 1 MiB f32 / operand / block; worst case (4 in + 1 out, f32,
                       # double-buffered) ~10 MiB VMEM -> fits v5e's 16 MiB scoped default.
                       # (v6e/v7x could go 4096 with vmem_limit_bytes; kept portable.)
MIN_BLOCK_ROWS = 256   # lower bound when splitting: each step still streams >=128 KiB/operand
TARGET_BLOCKS = 4      # aim for >=4 grid steps -> pipelining + both v7x TensorCores busy


def _round_up(x, m):
    return ((x + m - 1) // m) * m


def _loss_f32(x1, x2, y):
    """Stable elementwise BPR loss: -log(sigmoid(y*(x1-x2))) == softplus(-z)."""
    z = y.astype(jnp.float32) * (x1.astype(jnp.float32) - x2.astype(jnp.float32))
    return jnp.maximum(-z, 0.0) + jnp.log1p(jnp.exp(-jnp.abs(z)))


def _maybe_mask(loss, rows, block_r, need_mask):
    """Zero rows past the end of the array in the (only) partial boundary block."""
    if not need_mask:
        return loss
    rem = rows - pl.program_id(0) * block_r            # valid rows in this block (scalar)
    row = lax.broadcasted_iota(jnp.int32, loss.shape, 0)
    return jnp.where(row < rem, loss, 0.0)


def _partial_store(loss, o_ref, out_rows):
    if out_rows == 8:
        # (block_r,128) -> (block_r//8, 8, 128) keeps (8,128) vreg tiles intact
        # (free reshape); axis-0 sum is pure VPU adds; store is one full vreg.
        o_ref[...] = loss.reshape(-1, 8, LANES).sum(axis=0)
    else:
        o_ref[...] = jnp.sum(loss, axis=0, keepdims=True)


# ---------------- reduction='none' kernels ----------------
def _none_kernel(x1_ref, x2_ref, y_ref, o_ref):
    o_ref[...] = _loss_f32(x1_ref[...], x2_ref[...], y_ref[...]).astype(o_ref.dtype)


def _none_kernel_w(x1_ref, x2_ref, y_ref, w_ref, o_ref):
    l = w_ref[...].astype(jnp.float32) * _loss_f32(x1_ref[...], x2_ref[...], y_ref[...])
    o_ref[...] = l.astype(o_ref.dtype)


# ---------------- reduction='mean'/'sum' kernels (per-block partial sums) ----------------
def _partial_kernel(x1_ref, x2_ref, y_ref, o_ref, *, rows, block_r, need_mask, out_rows):
    loss = _loss_f32(x1_ref[...], x2_ref[...], y_ref[...])
    loss = _maybe_mask(loss, rows, block_r, need_mask)
    _partial_store(loss, o_ref, out_rows)


def _partial_kernel_w(x1_ref, x2_ref, y_ref, w_ref, o_ref, *, rows, block_r, need_mask,
                      out_rows):
    loss = w_ref[...].astype(jnp.float32) * _loss_f32(x1_ref[...], x2_ref[...], y_ref[...])
    loss = _maybe_mask(loss, rows, block_r, need_mask)
    _partial_store(loss, o_ref, out_rows)


def _choose_block_rows(rows):
    """Pick (block_rows, num_blocks) for the (rows, 128) slab."""
    if rows <= MIN_BLOCK_ROWS:
        return rows, 1                                  # block == full dim (always legal)
    br = max(MIN_BLOCK_ROWS, min(MAX_BLOCK_ROWS, pl.cdiv(rows, TARGET_BLOCKS)))
    br = _round_up(br, 32)                              # safe sublane multiple for any dtype
    return br, pl.cdiv(rows, br)


def bpr_ranking_loss(input1, input2, target, weight=None, reduction="mean"):
    """Pallas TPU implementation of BPRankingLoss.forward."""
    if not (input1.ndim == input2.ndim == target.ndim):
        raise RuntimeError(
            "bayesian_personalized_ranking_loss : All input tensors should have same "
            f"dimension but got sizes: input1: {input1.shape}, input2: {input2.shape}, "
            f"target: {target.shape}"
        )
    if reduction not in ("none", "mean", "sum"):
        raise ValueError(f"{reduction} is not a valid value for reduction")

    scalar_in = input1.ndim == 0
    if scalar_in:
        input1, input2, target = (a.reshape(1) for a in (input1, input2, target))
        if weight is not None:
            weight = weight.reshape(1)
    if input1.ndim != 1:
        raise RuntimeError(
            "bayesian_personalized_ranking_loss: inputs must be 0-D or 1-D minibatches"
        )

    has_weight = weight is not None
    dtypes = [input1.dtype, input2.dtype, target.dtype] + ([weight.dtype] if has_weight else [])
    out_dtype = jnp.result_type(*dtypes)

    n = input1.shape[0]
    rows = n // LANES          # lane-aligned rows handled by the kernel
    n_main = rows * LANES

    # ---- <128-element tail (and any N < 128 / 0-D input): tiny JAX epilogue.
    # Replaces the old jnp.pad full-copy of every operand with a few-element op.
    tail_loss = None
    if n_main != n:
        tl = _loss_f32(input1[n_main:], input2[n_main:], target[n_main:])
        if has_weight:
            tl = weight[n_main:].astype(jnp.float32) * tl
        tail_loss = tl

    cp = pltpu.CompilerParams(dimension_semantics=("parallel",))
    # TODO(synk): if an xprof trace on v7x shows one idle TensorCore, switch the grid
    # axis to pltpu.CORE_PARALLEL; "parallel" is expected to shard it across both cores.

    main_none = None
    main_partials = None
    if rows > 0:
        def as_blocks(a):
            m = a if n_main == n else a[:n_main]        # no slice at all when lane-aligned
            return m.reshape(rows, LANES)               # contiguous reshape (bitcast)

        operands = [as_blocks(input1), as_blocks(input2), as_blocks(target)]
        if has_weight:
            operands.append(as_blocks(weight))

        block_r, num_blocks = _choose_block_rows(rows)
        in_specs = [pl.BlockSpec((block_r, LANES), lambda i: (i, 0)) for _ in operands]

        if reduction == "none":
            kernel = _none_kernel_w if has_weight else _none_kernel
            main_none = pl.pallas_call(
                kernel,
                out_shape=jax.ShapeDtypeStruct((rows, LANES), out_dtype),
                grid=(num_blocks,),
                in_specs=in_specs,
                out_specs=pl.BlockSpec((block_r, LANES), lambda i: (i, 0)),
                compiler_params=cp,
            )(*operands)
        else:
            # Boundary block (if any) reads garbage rows past `rows`; mask only then.
            need_mask = (num_blocks * block_r) != rows
            out_rows = 8 if block_r % 8 == 0 else 1      # full-vreg partial store when possible
            base = _partial_kernel_w if has_weight else _partial_kernel
            kernel = functools.partial(base, rows=rows, block_r=block_r,
                                       need_mask=need_mask, out_rows=out_rows)
            main_partials = pl.pallas_call(
                kernel,
                out_shape=jax.ShapeDtypeStruct((num_blocks * out_rows, LANES), jnp.float32),
                grid=(num_blocks,),
                in_specs=in_specs,
                out_specs=pl.BlockSpec((out_rows, LANES), lambda i: (i, 0)),
                compiler_params=cp,
            )(*operands)

    if reduction == "none":
        pieces = []
        if main_none is not None:
            pieces.append(main_none.reshape(n_main))
        if tail_loss is not None:
            pieces.append(tail_loss.astype(out_dtype))
        if not pieces:                                   # empty input
            out = jnp.zeros((0,), out_dtype)
        else:
            out = pieces[0] if len(pieces) == 1 else jnp.concatenate(pieces)
        return out.reshape(()) if scalar_in else out

    total = jnp.float32(0.0)
    if main_partials is not None:
        total = total + jnp.sum(main_partials)           # tiny (num_blocks*8, 128) reduce in XLA
    if tail_loss is not None:
        total = total + jnp.sum(tail_loss)
    if reduction == "mean":
        total = total / n                                # matches torch .mean(): divide by N
    return total.astype(out_dtype)


# ---------------- pure-JAX reference for testing ----------------
def _reference(x1, x2, y, w=None, reduction="mean"):
    z = y.astype(jnp.float32) * (x1.astype(jnp.float32) - x2.astype(jnp.float32))
    loss = -jax.nn.log_sigmoid(z)
    if w is not None:
        loss = w.astype(jnp.float32) * loss
    if reduction == "none":
        return loss
    if reduction == "mean":
        return loss.mean()
    return loss.sum()


if __name__ == "__main__":
    ok = True

    def close(a, b, rtol=1e-5, atol=1e-5):
        a = jnp.asarray(a, jnp.float32)
        b = jnp.asarray(b, jnp.float32)
        return bool(jnp.allclose(a, b, rtol=rtol, atol=atol))

    def make(key, m, with_weight):
        k1, k2, k3, k4 = jax.random.split(key, 4)
        x1 = jax.random.normal(k1, (m,), jnp.float32)
        x2 = jax.random.normal(k2, (m,), jnp.float32)
        y = jnp.where(jax.random.bernoulli(k3, 0.5, (m,)), 1.0, -1.0).astype(jnp.float32)
        w = jax.random.uniform(k4, (m,), jnp.float32, 0.5, 1.5) if with_weight else None
        return x1, x2, y, w

    root = jax.random.PRNGKey(0)
    k_a, k_b, k_c, k_d = jax.random.split(root, 4)

    # --- 1) tiny 1-D minibatch (N=8, all-tail / JAX epilogue path), with weight ---
    x1, x2, y, w = make(k_a, 8, True)
    for red in ("mean", "sum", "none"):
        out = jax.block_until_ready(bpr_ranking_loss(x1, x2, y, weight=w, reduction=red))
        ok &= close(out, _reference(x1, x2, y, w, red))

    # --- 2) lane-unaligned N=1000 (single-block kernel + 104-element tail), no weight ---
    x1, x2, y, _ = make(k_b, 1000, False)
    for red in ("mean", "none"):
        out = jax.block_until_ready(bpr_ranking_loss(x1, x2, y, reduction=red))
        ok &= close(out, _reference(x1, x2, y, None, red))

    # --- 3) N=40000: multi-block grid, boundary-row mask, (8,128) partial stores, weight ---
    x1, x2, y, w = make(k_c, 40000, True)
    for red in ("mean", "sum", "none"):
        out = jax.block_until_ready(bpr_ranking_loss(x1, x2, y, weight=w, reduction=red))
        ok &= close(out, _reference(x1, x2, y, w, red))

    # --- 4) larger unaligned N=300000 (adaptive block size, 4 grid steps), no weight ---
    x1, x2, y, _ = make(k_d, 300000, False)
    out = jax.block_until_ready(bpr_ranking_loss(x1, x2, y, reduction="mean"))
    ok &= close(out, _reference(x1, x2, y, None, "mean"))

    # --- 5) bf16 inputs: native-dtype streaming; 'none' returns bf16 ---
    x1b, x2b, yb = (a.astype(jnp.bfloat16) for a in make(k_c, 40000, False)[:3])
    out_sum = jax.block_until_ready(bpr_ranking_loss(x1b, x2b, yb, reduction="sum"))
    ok &= close(out_sum, _reference(x1b, x2b, yb, None, "sum"), rtol=2e-2, atol=2e-2)
    out_none = jax.block_until_ready(bpr_ranking_loss(x1b, x2b, yb, reduction="none"))
    ok &= (out_none.dtype == jnp.bfloat16)
    ok &= close(out_none, _reference(x1b, x2b, yb, None, "none"), rtol=2e-2, atol=2e-2)

    print("KERNEL_OK" if ok else "KERNEL_MISMATCH")
</pallas_src>

<mosaic_0001>
module attributes {stable_mosaic.version = 11 : i64} {
  func.func @_partial_kernel(%arg0: i32, %arg1: memref<7x128xf32, #tpu.memory_space<vmem>>, %arg2: memref<7x128xf32, #tpu.memory_space<vmem>>, %arg3: memref<7x128xf32, #tpu.memory_space<vmem>>, %arg4: memref<1x128xf32, #tpu.memory_space<vmem>>) attributes {dimension_semantics = [#tpu.dimension_semantics<parallel>], iteration_bounds = array<i64: 1>, scalar_prefetch = 0 : i64, scratch_operands = 0 : i64, tpu.core_type = #tpu.core_type<tc>, window_params = [{transform_indices = @transform_0, window_bounds = array<i64: 7, 128>}, {transform_indices = @transform_1, window_bounds = array<i64: 7, 128>}, {transform_indices = @transform_2, window_bounds = array<i64: 7, 128>}, {transform_indices = @transform_3, window_bounds = array<i64: 1, 128>}]} {
    %c0 = arith.constant 0 : index
    %c0_0 = arith.constant 0 : index
    %0 = vector.load %arg1[%c0, %c0_0] : memref<7x128xf32, #tpu.memory_space<vmem>>, vector<7x128xf32>
    %c0_1 = arith.constant 0 : index
    %c0_2 = arith.constant 0 : index
    %1 = vector.load %arg2[%c0_1, %c0_2] : memref<7x128xf32, #tpu.memory_space<vmem>>, vector<7x128xf32>
    %c0_3 = arith.constant 0 : index
    %c0_4 = arith.constant 0 : index
    %2 = vector.load %arg3[%c0_3, %c0_4] : memref<7x128xf32, #tpu.memory_space<vmem>>, vector<7x128xf32>
    %3 = arith.subf %0, %1 : vector<7x128xf32>
    %4 = arith.mulf %2, %3 : vector<7x128xf32>
    %cst = arith.constant 0.000000e+00 : f32
    %5 = vector.broadcast %cst : f32 to vector<7x128xf32>
    %6 = arith.subf %5, %4 : vector<7x128xf32>
    %cst_5 = arith.constant 0.000000e+00 : f32
    %7 = vector.broadcast %cst_5 : f32 to vector<7x128xf32>
    %8 = arith.maximumf %6, %7 : vector<7x128xf32>
    %9 = math.absf %4 : vector<7x128xf32>
    %cst_6 = arith.constant 0.000000e+00 : f32
    %10 = vector.broadcast %cst_6 : f32 to vector<7x128xf32>
    %11 = arith.subf %10, %9 : vector<7x128xf32>
    %12 = math.exp %11 : vector<7x128xf32>
    %13 = math.log1p %12 : vector<7x128xf32>
    %14 = arith.addf %8, %13 : vector<7x128xf32>
    %cst_7 = arith.constant dense<0.000000e+00> : vector<128xf32>
    %15 = vector.multi_reduction <add>, %14, %cst_7 [0] : vector<7x128xf32> to vector<128xf32>
    %16 = vector.shape_cast %15 : vector<128xf32> to vector<1x128xf32>
    %c0_8 = arith.constant 0 : index
    %c0_9 = arith.constant 0 : index
    %17 = vector.load %arg4[%c0_8, %c0_9] : memref<1x128xf32, #tpu.memory_space<vmem>>, vector<1x128xf32>
    tpu.vector_store %arg4[%c0_8, %c0_9], %16 {strides = array<i32>} : memref<1x128xf32, #tpu.memory_space<vmem>>, vector<1x128xf32>,
    return
  }
  func.func @transform_0(%arg0: i32) -> (i32, i32) {
    %c0_i32 = arith.constant 0 : i32
    %c0_i32_0 = arith.constant 0 : i32
    return %arg0, %c0_i32 : i32, i32
  }
  func.func @transform_1(%arg0: i32) -> (i32, i32) {
    %c0_i32 = arith.constant 0 : i32
    %c0_i32_0 = arith.constant 0 : i32
    return %arg0, %c0_i32 : i32, i32
  }
  func.func @transform_2(%arg0: i32) -> (i32, i32) {
    %c0_i32 = arith.constant 0 : i32
    %c0_i32_0 = arith.constant 0 : i32
    return %arg0, %c0_i32 : i32, i32
  }
  func.func @transform_3(%arg0: i32) -> (i32, i32) {
    %c0_i32 = arith.constant 0 : i32
    %c0_i32_0 = arith.constant 0 : i32
    return %arg0, %c0_i32 : i32, i32
  }
}

</mosaic_0001>

<llo_original>
// kernel: tpu_custom_call.1
$region0: #{tpu_custom_call.1}
  #allocation0 [shape = 'u32[]', space=smem, size = 0x4, offset = 0x4, fixed_abs, tag = 'smem constant byte address 0x4 - core index']
  #allocation1 [shape = 'u32[72,128]{1,0:T(1,128)}', space=vmem, size = 0x9000, scoped, tag = 'internal scratch']
  %s0 = inlined_call_operand.hbm [shape: f32[7,128], index: 0, kind: input, shape index: {}]
  %s1 = inlined_call_operand.hbm [shape: f32[7,128], index: 1, kind: input, shape index: {}]
  %s2 = inlined_call_operand.hbm [shape: f32[7,128], index: 2, kind: input, shape index: {}]
  %s3 = inlined_call_operand.hbm [shape: f32[1,128], index: 3, kind: output, shape index: {}]
  %s4 = sld [smem:[#allocation0]]
  $region34: #{tpu_custom_call.1} parent=0
    _
  %s6 = ssub.s32 1, %s4
  %s7 = scalar_select 0, %s6, %s4
  $region1: #{tpu_custom_call.1} parent=0
    #allocation2 [shape = 'u8[4096]{0}', space=vmem, size = 0x1000, scoped, tag = 'input window, operand 0, single buffered']
    #allocation3 [shape = 's32[1]{0}', space=sflag, size = 0x4, scoped, tag = 'scoped memory for tpu_custom_call.1']
    #allocation4 [shape = 's32[1]{0}', space=sflag, size = 0x4, scoped, tag = 'scoped memory for tpu_custom_call.1']
    #allocation5 [shape = 'u8[4096]{0}', space=vmem, size = 0x1000, scoped, tag = 'input window, operand 1, single buffered']
    #allocation6 [shape = 's32[1]{0}', space=sflag, size = 0x4, scoped, tag = 'scoped memory for tpu_custom_call.1']
    #allocation7 [shape = 'u8[4096]{0}', space=vmem, size = 0x1000, scoped, tag = 'input window, operand 2, single buffered']
    #allocation8 [shape = 'u8[512]{0}', space=vmem, size = 0x400, scoped, tag = 'output window, operand 0, single buffered']
    %8 = vsyncpa [#allocation3], 0
    %9 = vsyncpa [#allocation6], 0
    %10 = vsyncpa [#allocation4], 0
    // Predicated region
    $region2: #{tpu_custom_call.1} parent=1 // pred_check
      _
    $region3: #{tpu_custom_call.1} parent=1 // pred_check_branch
      %12 = sbr.rel (0) target = $region5
    $region4: #{tpu_custom_call.1} parent=1 // pred_region
      %14 = vsyncadd [#allocation3], 0
      %s16 = sshll.u32 %s0, 4
      %s17 = int_to_ptr.hbm [resolvable:$true] %s16
      %s18 = sshll.u32 [#allocation2], 4
      %s19 = int_to_ptr.vmem [resolvable:$true] %s18
      %21 = dma.hbm_to_vmem [thread:$0]  %s17, 128, %s19, [#allocation3]
    $region5: #{tpu_custom_call.1} parent=1 // pred_fallthru
      _
    // Predicated region
    $region6: #{tpu_custom_call.1} parent=1 // pred_check
      _
    $region7: #{tpu_custom_call.1} parent=1 // pred_check_branch
      %23 = sbr.rel (0) target = $region9
    $region8: #{tpu_custom_call.1} parent=1 // pred_region
      %25 = vsyncadd [#allocation6], 0
      %s27 = sshll.u32 %s1, 4
      %s28 = int_to_ptr.hbm [resolvable:$true] %s27
      %s29 = sshll.u32 [#allocation5], 4
      %s30 = int_to_ptr.vmem [resolvable:$true] %s29
      %32 = dma.hbm_to_vmem [thread:$0]  %s28, 128, %s30, [#allocation6]
    $region9: #{tpu_custom_call.1} parent=1 // pred_fallthru
      _
    // Predicated region
    $region10: #{tpu_custom_call.1} parent=1 // pred_check
      _
    $region11: #{tpu_custom_call.1} parent=1 // pred_check_branch
      %34 = sbr.rel (0) target = $region13
    $region12: #{tpu_custom_call.1} parent=1 // pred_region
      %36 = vsyncadd [#allocation6], 0
      %s38 = sshll.u32 %s2, 4
      %s39 = int_to_ptr.hbm [resolvable:$true] %s38
      %s40 = sshll.u32 [#allocation7], 4
      %s41 = int_to_ptr.vmem [resolvable:$true] %s40
      %43 = dma.hbm_to_vmem [thread:$0]  %s39, 128, %s41, [#allocation6]
    $region13: #{tpu_custom_call.1} parent=1 // pred_fallthru
      _
    // Predicated region
    $region14: #{tpu_custom_call.1} parent=1 // pred_check
      _
    $region15: #{tpu_custom_call.1} parent=1 // pred_check_branch
      %45 = sbr.rel (0) target = $region17
    $region16: #{tpu_custom_call.1} parent=1 // pred_region
      %47 = dma.done [#allocation3], 128
    $region17: #{tpu_custom_call.1} parent=1 // pred_fallthru
      _
    // Predicated region
    $region18: #{tpu_custom_call.1} parent=1 // pred_check
      _
    $region19: #{tpu_custom_call.1} parent=1 // pred_check_branch
      %49 = sbr.rel (0) target = $region21
    $region20: #{tpu_custom_call.1} parent=1 // pred_region
      %51 = dma.done [#allocation6], 128
    $region21: #{tpu_custom_call.1} parent=1 // pred_fallthru
      _
    // Predicated region
    $region22: #{tpu_custom_call.1} parent=1 // pred_check
      _
    $region23: #{tpu_custom_call.1} parent=1 // pred_check_branch
      %53 = sbr.rel (0) target = $region25
    $region24: #{tpu_custom_call.1} parent=1 // pred_region
      %55 = dma.done [#allocation6], 128
    $region25: #{tpu_custom_call.1} parent=1 // pred_fallthru
      _
    %v56 = vld [vmem:[#allocation2] sm:$0x7f]
    %v57 = vld [vmem:[#allocation5] sm:$0x7f]
    %v58 = vld [vmem:[#allocation7] sm:$0x7f]
    %v59 = vsub.f32 %v56, %v57
    %v60 = vmul.f32 %v58, %v59
    %v61 = vsub.f32 0.0, %v60
    %v62 = vmax.f32 %v61, 0.0
    %v63 = vand.u32 2147483647, %v60
    %v64 = vsub.f32 0.0, %v63
    %v65 = vmul.f32 %v64, 1.442695
    %v66 = vpow.pop %v65
    %v67 = vadd.f32 %v66, 1.0
    %v68 = vlog2.pop %v67
    %v69 = vmul.f32 %v68, 0.6931472
    %v70 = vmul.f32 -0.5, %v66
    %v71 = vadd.f32 %v70, 1.0
    %v72 = vmul.f32 %v71, %v66
    %v73 = vand.u32 2147483647, %v66
    %vm74 = vcmp.lt.f32.partialorder %v73, 0.0004427343
    %v75 = vsel %vm74, %v72, %v69
    %v76 = vadd.f32 %v62, %v75
    %vm77 = vcmask 1046528
    %v78 = vsel %vm77, %v76, 0.0
    %v79 = vrot.slane %v78, 4
    %v80 = vadd.f32 %v78, %v79
    %v81 = vrot.slane %v80, 2
    %v82 = vadd.f32 %v80, %v81
    %v83 = vrot.slane %v82, 1
    %v84 = vadd.f32 %v82, %v83
    %85 = vst [vmem:[#allocation8] sm:$0x1] %v84
    // Predicated region
    $region26: #{tpu_custom_call.1} parent=1 // pred_check
      _
    $region27: #{tpu_custom_call.1} parent=1 // pred_check_branch
      %87 = sbr.rel (0) target = $region29
    $region28: #{tpu_custom_call.1} parent=1 // pred_region
      %89 = vsyncadd [#allocation4], 0
      %s91 = sshll.u32 [#allocation8], 4
      %s92 = int_to_ptr.vmem [resolvable:$true] %s91
      %s93 = sshll.u32 %s3, 4
      %s94 = int_to_ptr.hbm [resolvable:$true] %s93
      %96 = dma.vmem_to_hbm [thread:$0]  %s92, 16, %s94, [#allocation4]
    $region29: #{tpu_custom_call.1} parent=1 // pred_fallthru
      _
    // Predicated region
    $region30: #{tpu_custom_call.1} parent=1 // pred_check
      _
    $region31: #{tpu_custom_call.1} parent=1 // pred_check_branch
      %98 = sbr.rel (0) target = $region33
    $region32: #{tpu_custom_call.1} parent=1 // pred_region
      %100 = dma.done [#allocation4], 16
    $region33: #{tpu_custom_call.1} parent=1 // pred_fallthru
      _
    %101 = vsyncpa [#allocation3], 1
    %102 = vsyncpa [#allocation6], 1
    %103 = vsyncpa [#allocation4], 1

</llo_original>
